<compile_context>
chip_gen: v5e
topology: v5e:2x2
jax: 0.10.0
libtpu: 0.0.40
codegen_flags: <defaults>
</compile_context>

<pallas_src>
import math
import jax
import jax.numpy as jnp
from jax import lax
from jax.experimental import pallas as pl
from jax.experimental.pallas import tpu as pltpu

# ---------------- synthetic config ----------------
L = 8              # number of labels (label_num)
T = 8              # tokenized label-name length
H = 32             # config.hidden_size
NUM_HEADS = 4      # config.num_attention_heads
HEAD_DIM = H // NUM_HEADS
INTER = 64         # config.intermediate_size
NUM_LAYERS = 1     # layer=1
VOCAB = 50
PAD_ID = 0
SCALING = HEAD_DIM ** -0.5
LN_EPS = 1e-5      # nn.LayerNorm default
MAX_EDGE = 15      # edge_mat last dim in the reference
BIAS_W = 3 * H     # packed slab lane width (96)
ROWS_PER_LAYER = H + H + H + INTER + 8   # wqkv | wo | w1 | w2 | bias rows = 168


# ---------------- shared helpers (used in kernel AND reference) ----------------
def _layer_norm(x, w, b):
    mu = jnp.mean(x, axis=-1, keepdims=True)
    var = jnp.mean((x - mu) ** 2, axis=-1, keepdims=True)
    return (x - mu) * jax.lax.rsqrt(var + LN_EPS) * w + b


def _gelu_new(x):
    # HuggingFace ACT2FN['gelu_new'] (tanh approximation)
    return 0.5 * x * (1.0 + jnp.tanh(math.sqrt(2.0 / math.pi)
                                     * (x + 0.044715 * x * x * x)))


# ---------------- fused Pallas kernel ----------------
def _graph_encoder_kernel(misc_ref, w_ref, out_ref, attn_scr):
    # misc slab: [L, H+L] = [ x0 (pooled label emb + id emb) | extra_attn bias ]
    misc = misc_ref[...]
    x = misc[:, :H]                      # [L, H]
    extra = misc[:, H:H + L]             # [L, L] graphormer bias (precomputed)

    for layer in range(NUM_LAYERS):      # statically unrolled
        base = layer * ROWS_PER_LAYER
        wqkv = w_ref[base:base + H, :]                              # [H, 3H] (q cols pre-scaled)
        wo = w_ref[base + H:base + 2 * H, 0:H]                      # [H, H]
        w1 = w_ref[base + 2 * H:base + 3 * H, 0:INTER]              # [H, INTER]
        w2 = w_ref[base + 3 * H:base + 3 * H + INTER, 0:H]          # [INTER, H]
        b = w_ref[base + 3 * H + INTER:base + ROWS_PER_LAYER, :]    # [8, 3H] bias/LN pack
        b_qkv = b[0:1, :]
        b_o = b[1:2, :H]
        ln1_w, ln1_b = b[2:3, :H], b[3:4, :H]
        b_1 = b[4:5, :INTER]
        b_2, ln2_w, ln2_b = b[5:6, :H], b[6:7, :H], b[7:8, :H]

        # fused Q/K/V projection: single MXU pass, scaling folded into q cols/bias
        qkv = jnp.dot(x, wqkv, preferred_element_type=jnp.float32) + b_qkv   # [L, 3H]

        # per-head attention on static 8-lane slices (no reshape/swapaxes relayouts)
        for h in range(NUM_HEADS):
            lo = h * HEAD_DIM
            qh = qkv[:, lo:lo + HEAD_DIM]                     # [L, HD]
            kh = qkv[:, H + lo:H + lo + HEAD_DIM]             # [L, HD]
            vh = qkv[:, 2 * H + lo:2 * H + lo + HEAD_DIM]     # [L, HD]
            s = lax.dot_general(qh, kh, (((1,), (1,)), ((), ())),
                                preferred_element_type=jnp.float32) + extra  # [L, L]
            s = s - jnp.max(s, axis=-1, keepdims=True)
            p = jnp.exp(s)
            p = p * pl.reciprocal(jnp.sum(p, axis=-1, keepdims=True), approx=True)
            attn_scr[:, lo:lo + HEAD_DIM] = jnp.dot(
                p, vh, preferred_element_type=jnp.float32)    # head out at static lane offset

        attn = jnp.dot(attn_scr[...], wo, preferred_element_type=jnp.float32) + b_o

        # residual + LN  ->  FFN  ->  residual + LN
        y = _layer_norm(x + attn, ln1_w, ln1_b)
        h1 = _gelu_new(jnp.dot(y, w1, preferred_element_type=jnp.float32) + b_1)
        h2 = jnp.dot(h1, w2, preferred_element_type=jnp.float32) + b_2
        x = _layer_norm(y + h2, ln2_w, ln2_b)

    out_ref[...] = x


# ---------------- forward wrapper (single pallas_call, no grid) ----------------
@jax.jit
def graph_encoder_forward(misc, w_slab):
    vmem = pl.BlockSpec(memory_space=pltpu.MemorySpace.VMEM)
    return pl.pallas_call(
        _graph_encoder_kernel,
        out_shape=jax.ShapeDtypeStruct((L, H), jnp.float32),
        in_specs=[vmem, vmem],
        out_specs=vmem,
        scratch_shapes=[pltpu.VMEM((L, H), jnp.float32)],   # per-head attention output slab
    )(misc, w_slab)


# ---------------- synthetic graph structure (replicates __init__ logic) ----------
def build_graph_structures():
    # synthetic label hierarchy (child -> parent), replacing torch.load('slot.pt')
    path_dict = {0: 0, 1: 0, 2: 0, 3: 1, 4: 1, 5: 2, 6: 2, 7: 3}

    def get_root(n):
        ret = []
        while path_dict[n] != n:
            ret.append(n)
            n = path_dict[n]
        ret.append(n)
        return ret

    inverse = {i: get_root(i) + [-1] for i in range(L)}
    node_list = {}

    def get_distance(n1, n2):
        p = q = 0
        node_list[(n1, n2)] = a = []
        l1, l2 = inverse[n1], inverse[n2]
        while p < len(l1) and q < len(l2):
            if l1[p] > l2[q]:
                a.append(l1[p]); p += 1
            elif l1[p] < l2[q]:
                a.append(l2[q]); q += 1
            else:
                break
        return p + q

    dist = [[0] * L for _ in range(L)]
    for i in range(L):
        for j in range(L):
            # torch map_: distance_mat[i, j] = get_distance(j, i)
            dist[i][j] = get_distance(j, i)

    edge = [[0] * MAX_EDGE for _ in range(L * L)]
    for i in range(L):
        for j in range(L):
            el = node_list[(i, j)]
            for t, e in enumerate(el):
                edge[i * L + j][t] = e + 1

    dist_flat = jnp.asarray(dist, dtype=jnp.int32).reshape(-1)     # [L*L]
    edge_mat = jnp.asarray(edge, dtype=jnp.int32)                  # [L*L, 15]
    return dist_flat, edge_mat


# ---------------- deterministic parameter init (natural / unpacked form) --------
def init_params(key):
    keys = iter(jax.random.split(key, 64))

    def nrm(shape, scale=0.02):
        return scale * jax.random.normal(next(keys), shape, dtype=jnp.float32)

    emb_table = nrm((VOCAB, H))                                    # word embeddings
    id_table = nrm((L + 1, H)).at[L].set(0.0)                      # id_embedding, padding_idx=L
    de_table = nrm((20, 1)).at[0].set(0.0)                         # distance_embedding, padding_idx=0
    ee_table = nrm((L + 1, 1)).at[0].set(0.0)                      # edge_embedding, padding_idx=0

    layers = []
    for _ in range(NUM_LAYERS):
        layers.append(dict(
            wq=nrm((H, H)), bq=nrm((1, H)),
            wk=nrm((H, H)), bk=nrm((1, H)),
            wv=nrm((H, H)), bv=nrm((1, H)),
            wo=nrm((H, H)), bo=nrm((1, H)),
            ln1_w=jnp.ones((1, H), jnp.float32), ln1_b=jnp.zeros((1, H), jnp.float32),
            w1=nrm((H, INTER)), b1=nrm((1, INTER)),
            w2=nrm((INTER, H)), b2=nrm((1, H)),
            ln2_w=jnp.ones((1, H), jnp.float32), ln2_b=jnp.zeros((1, H), jnp.float32),
        ))

    dist_flat, edge_mat = build_graph_structures()
    return dict(emb_table=emb_table, id_table=id_table,
                de_table=de_table, ee_table=ee_table,
                dist_flat=dist_flat, edge_mat=edge_mat, layers=layers)


# ---------------- pack params: precompute constants + fuse into 2 slabs ----------
def pack_params(params, label_name):
    # ---- constant work hoisted out of the kernel (all frozen in eval mode) ----
    # masked mean-pool of the (static) tokenized label names + id embedding
    mask = (label_name != PAD_ID).astype(jnp.float32)                      # [L, T]
    tok_emb = params["emb_table"][label_name]                              # [L, T, H]
    pooled = (tok_emb * mask[:, :, None]).sum(axis=1) / mask.sum(axis=1, keepdims=True)
    x0 = pooled + params["id_table"][:L]                                   # [L, H]

    # graphormer extra_attn bias: de[dist] + sum_t ee[edge] / (dist + 1e-8)
    dist_flat = params["dist_flat"]
    de = params["de_table"][dist_flat, 0]                                  # [L*L]
    ee = params["ee_table"][params["edge_mat"], 0].sum(axis=1)             # [L*L]
    extra = (de + ee / (dist_flat.astype(jnp.float32) + 1e-8)).reshape(L, L)

    misc = jnp.concatenate([x0, extra], axis=1)                            # [L, H+L]

    # ---- weight slab: one [NL*168, 96] array ----
    def pad_lanes(a):
        return jnp.pad(a, ((0, 0), (0, BIAS_W - a.shape[1])))

    def row(vec):
        vec = vec.reshape(-1)
        return jnp.pad(vec, (0, BIAS_W - vec.shape[0]))[None, :]

    pieces = []
    for lp in params["layers"]:
        # fold the 1/sqrt(head_dim) scaling into the q columns / q bias
        wqkv = jnp.concatenate([lp["wq"] * SCALING, lp["wk"], lp["wv"]], axis=1)   # [H, 3H]
        b_qkv = jnp.concatenate([lp["bq"] * SCALING, lp["bk"], lp["bv"]], axis=1)  # [1, 3H]
        bias = jnp.concatenate([
            b_qkv,                                                                  # row 0
            row(lp["bo"]), row(lp["ln1_w"]), row(lp["ln1_b"]),                      # rows 1-3
            row(lp["b1"]), row(lp["b2"]), row(lp["ln2_w"]), row(lp["ln2_b"]),       # rows 4-7
        ], axis=0)                                                                  # [8, 3H]
        pieces += [wqkv, pad_lanes(lp["wo"]), pad_lanes(lp["w1"]),
                   pad_lanes(lp["w2"]), bias]
    w_slab = jnp.concatenate(pieces, axis=0)                               # [NL*168, 96]

    return misc, w_slab


# ---------------- pure-JAX reference (unpacked, mirrors the PyTorch module) ------
def _ref_layer(x, ea, p):
    q = (x @ p["wq"] + p["bq"]) * SCALING
    k = x @ p["wk"] + p["bk"]
    v = x @ p["wv"] + p["bv"]
    outs = []
    for h in range(NUM_HEADS):
        sl = slice(h * HEAD_DIM, (h + 1) * HEAD_DIM)
        s = q[:, sl] @ k[:, sl].T + ea
        p_attn = jax.nn.softmax(s, axis=-1)
        outs.append(p_attn @ v[:, sl])
    attn = jnp.concatenate(outs, axis=-1) @ p["wo"] + p["bo"]
    y = _layer_norm(x + attn, p["ln1_w"], p["ln1_b"])
    h1 = _gelu_new(y @ p["w1"] + p["b1"])
    z = y + (h1 @ p["w2"] + p["b2"])
    return _layer_norm(z, p["ln2_w"], p["ln2_b"])


def _ref_forward(params, label_name):
    mask = (label_name != PAD_ID).astype(jnp.float32)
    tok_emb = params["emb_table"][label_name]
    pooled = (tok_emb * mask[:, :, None]).sum(axis=1) / mask.sum(axis=1, keepdims=True)
    x = pooled + params["id_table"][jnp.arange(L)]
    dist = params["dist_flat"]
    de = params["de_table"][dist, 0]
    ee = params["ee_table"][params["edge_mat"], 0].sum(axis=1)
    ea = (de + ee / (dist.astype(jnp.float32) + 1e-8)).reshape(L, L)
    for lp in params["layers"]:
        x = _ref_layer(x, ea, lp)
    return x


# ---------------- main ----------------
if __name__ == "__main__":
    root = jax.random.PRNGKey(0)
    k_params, k_ids = jax.random.split(root)

    params = init_params(k_params)

    # synthetic tokenized label names [L, T] with trailing padding (pad id 0);
    # in the PyTorch module label_name is a fixed (non-trainable) parameter.
    ids = jax.random.randint(k_ids, (L, T), 1, VOCAB, dtype=jnp.int32)
    lengths = jnp.array([3, 4, 5, 6, 7, 8, 2, 5], dtype=jnp.int32)
    label_name = jnp.where(jnp.arange(T)[None, :] < lengths[:, None], ids, PAD_ID)

    misc, w_slab = pack_params(params, label_name)

    out = jax.block_until_ready(graph_encoder_forward(misc, w_slab))
    ref = _ref_forward(params, label_name)

    assert out.shape == (L, H) and out.dtype == jnp.float32
    assert jnp.allclose(out, ref, rtol=2e-3, atol=2e-3), "Pallas kernel mismatch vs JAX reference"

    print("KERNEL_OK")
</pallas_src>

<mosaic_0001>
module attributes {stable_mosaic.version = 11 : i64} {
  func.func @_graph_encoder_kernel(%arg0: memref<8x40xf32, #tpu.memory_space<vmem>>, %arg1: memref<168x96xf32, #tpu.memory_space<vmem>>, %arg2: memref<8x32xf32, #tpu.memory_space<vmem>>, %arg3: memref<8x32xf32, #tpu.memory_space<vmem>>) attributes {dimension_semantics = [], scalar_prefetch = 0 : i64, scratch_operands = 1 : i64, tpu.core_type = #tpu.core_type<tc>} {
    %c0 = arith.constant 0 : index
    %c0_0 = arith.constant 0 : index
    %0 = vector.load %arg0[%c0, %c0_0] : memref<8x40xf32, #tpu.memory_space<vmem>>, vector<8x40xf32>
    %1 = vector.extract_strided_slice %0 {offsets = [0, 0], sizes = [8, 32], strides = [1, 1]} : vector<8x40xf32> to vector<8x32xf32>
    %2 = vector.extract_strided_slice %0 {offsets = [0, 32], sizes = [8, 8], strides = [1, 1]} : vector<8x40xf32> to vector<8x8xf32>
    %c0_1 = arith.constant 0 : index
    %c0_2 = arith.constant 0 : index
    %3 = vector.load %arg1[%c0_1, %c0_2] : memref<168x96xf32, #tpu.memory_space<vmem>>, vector<32x96xf32>
    %c32 = arith.constant 32 : index
    %c0_3 = arith.constant 0 : index
    %4 = vector.load %arg1[%c32, %c0_3] : memref<168x96xf32, #tpu.memory_space<vmem>>, vector<32x32xf32>
    %c64 = arith.constant 64 : index
    %c0_4 = arith.constant 0 : index
    %5 = vector.load %arg1[%c64, %c0_4] : memref<168x96xf32, #tpu.memory_space<vmem>>, vector<32x64xf32>
    %c96 = arith.constant 96 : index
    %c0_5 = arith.constant 0 : index
    %6 = vector.load %arg1[%c96, %c0_5] : memref<168x96xf32, #tpu.memory_space<vmem>>, vector<64x32xf32>
    %c160 = arith.constant 160 : index
    %c0_6 = arith.constant 0 : index
    %7 = vector.load %arg1[%c160, %c0_6] : memref<168x96xf32, #tpu.memory_space<vmem>>, vector<8x96xf32>
    %8 = vector.extract_strided_slice %7 {offsets = [0, 0], sizes = [1, 96], strides = [1, 1]} : vector<8x96xf32> to vector<1x96xf32>
    %9 = vector.extract_strided_slice %7 {offsets = [1, 0], sizes = [1, 32], strides = [1, 1]} : vector<8x96xf32> to vector<1x32xf32>
    %10 = vector.extract_strided_slice %7 {offsets = [2, 0], sizes = [1, 32], strides = [1, 1]} : vector<8x96xf32> to vector<1x32xf32>
    %11 = vector.extract_strided_slice %7 {offsets = [3, 0], sizes = [1, 32], strides = [1, 1]} : vector<8x96xf32> to vector<1x32xf32>
    %12 = vector.extract_strided_slice %7 {offsets = [4, 0], sizes = [1, 64], strides = [1, 1]} : vector<8x96xf32> to vector<1x64xf32>
    %13 = vector.extract_strided_slice %7 {offsets = [5, 0], sizes = [1, 32], strides = [1, 1]} : vector<8x96xf32> to vector<1x32xf32>
    %14 = vector.extract_strided_slice %7 {offsets = [6, 0], sizes = [1, 32], strides = [1, 1]} : vector<8x96xf32> to vector<1x32xf32>
    %15 = vector.extract_strided_slice %7 {offsets = [7, 0], sizes = [1, 32], strides = [1, 1]} : vector<8x96xf32> to vector<1x32xf32>
    %cst = arith.constant dense<0.000000e+00> : vector<8x96xf32>
    %16 = tpu.matmul %1, %3, %cst {dimension_numbers = #tpu.dot_dimension_numbers<[1], [0], [0], [1], [0, 0, 1, 1], [], []>} : vector<8x32xf32>, vector<32x96xf32>, vector<8x96xf32> -> vector<8x96xf32>
    %17 = vector.broadcast %8 : vector<1x96xf32> to vector<8x96xf32>
    %18 = arith.addf %16, %17 : vector<8x96xf32>
    %19 = vector.extract_strided_slice %18 {offsets = [0, 0], sizes = [8, 8], strides = [1, 1]} : vector<8x96xf32> to vector<8x8xf32>
    %20 = vector.extract_strided_slice %18 {offsets = [0, 32], sizes = [8, 8], strides = [1, 1]} : vector<8x96xf32> to vector<8x8xf32>
    %21 = vector.extract_strided_slice %18 {offsets = [0, 64], sizes = [8, 8], strides = [1, 1]} : vector<8x96xf32> to vector<8x8xf32>
    %cst_7 = arith.constant dense<0.000000e+00> : vector<8x8xf32>
    %22 = tpu.matmul %19, %20, %cst_7 {dimension_numbers = #tpu.dot_dimension_numbers<[1], [1], [0], [0], [0, 0, 1, 0], [], []>} : vector<8x8xf32>, vector<8x8xf32>, vector<8x8xf32> -> vector<8x8xf32>
    %23 = arith.addf %22, %2 : vector<8x8xf32>
    %cst_8 = arith.constant dense<0xFF800000> : vector<8xf32>
    %24 = vector.multi_reduction <maximumf>, %23, %cst_8 [1] : vector<8x8xf32> to vector<8xf32>
    %25 = vector.shape_cast %24 : vector<8xf32> to vector<8x1xf32>
    %26 = vector.broadcast %25 : vector<8x1xf32> to vector<8x8xf32>
    %27 = arith.subf %23, %26 : vector<8x8xf32>
    %28 = math.exp %27 : vector<8x8xf32>
    %cst_9 = arith.constant dense<0.000000e+00> : vector<8xf32>
    %29 = vector.multi_reduction <add>, %28, %cst_9 [1] : vector<8x8xf32> to vector<8xf32>
    %30 = vector.shape_cast %29 : vector<8xf32> to vector<8x1xf32>
    %31 = tpu.reciprocal %30 {approx = true} : vector<8x1xf32> -> vector<8x1xf32>
    %32 = vector.broadcast %31 : vector<8x1xf32> to vector<8x8xf32>
    %33 = arith.mulf %28, %32 : vector<8x8xf32>
    %cst_10 = arith.constant dense<0.000000e+00> : vector<8x8xf32>
    %34 = tpu.matmul %33, %21, %cst_10 {dimension_numbers = #tpu.dot_dimension_numbers<[1], [0], [0], [1], [0, 0, 1, 1], [], []>} : vector<8x8xf32>, vector<8x8xf32>, vector<8x8xf32> -> vector<8x8xf32>
    %c0_11 = arith.constant 0 : index
    %c0_12 = arith.constant 0 : index
    %35 = vector.load %arg3[%c0_11, %c0_12] : memref<8x32xf32, #tpu.memory_space<vmem>>, vector<8x8xf32>
    tpu.vector_store %arg3[%c0_11, %c0_12], %34 {strides = array<i32>} : memref<8x32xf32, #tpu.memory_space<vmem>>, vector<8x8xf32>,
    %36 = vector.extract_strided_slice %18 {offsets = [0, 8], sizes = [8, 8], strides = [1, 1]} : vector<8x96xf32> to vector<8x8xf32>
    %37 = vector.extract_strided_slice %18 {offsets = [0, 40], sizes = [8, 8], strides = [1, 1]} : vector<8x96xf32> to vector<8x8xf32>
    %38 = vector.extract_strided_slice %18 {offsets = [0, 72], sizes = [8, 8], strides = [1, 1]} : vector<8x96xf32> to vector<8x8xf32>
    %cst_13 = arith.constant dense<0.000000e+00> : vector<8x8xf32>
    %39 = tpu.matmul %36, %37, %cst_13 {dimension_numbers = #tpu.dot_dimension_numbers<[1], [1], [0], [0], [0, 0, 1, 0], [], []>} : vector<8x8xf32>, vector<8x8xf32>, vector<8x8xf32> -> vector<8x8xf32>
    %40 = arith.addf %39, %2 : vector<8x8xf32>
    %cst_14 = arith.constant dense<0xFF800000> : vector<8xf32>
    %41 = vector.multi_reduction <maximumf>, %40, %cst_14 [1] : vector<8x8xf32> to vector<8xf32>
    %42 = vector.shape_cast %41 : vector<8xf32> to vector<8x1xf32>
    %43 = vector.broadcast %42 : vector<8x1xf32> to vector<8x8xf32>
    %44 = arith.subf %40, %43 : vector<8x8xf32>
    %45 = math.exp %44 : vector<8x8xf32>
    %cst_15 = arith.constant dense<0.000000e+00> : vector<8xf32>
    %46 = vector.multi_reduction <add>, %45, %cst_15 [1] : vector<8x8xf32> to vector<8xf32>
    %47 = vector.shape_cast %46 : vector<8xf32> to vector<8x1xf32>
    %48 = tpu.reciprocal %47 {approx = true} : vector<8x1xf32> -> vector<8x1xf32>
    %49 = vector.broadcast %48 : vector<8x1xf32> to vector<8x8xf32>
    %50 = arith.mulf %45, %49 : vector<8x8xf32>
    %cst_16 = arith.constant dense<0.000000e+00> : vector<8x8xf32>
    %51 = tpu.matmul %50, %38, %cst_16 {dimension_numbers = #tpu.dot_dimension_numbers<[1], [0], [0], [1], [0, 0, 1, 1], [], []>} : vector<8x8xf32>, vector<8x8xf32>, vector<8x8xf32> -> vector<8x8xf32>
    %c0_17 = arith.constant 0 : index
    %c8 = arith.constant 8 : index
    %52 = vector.load %arg3[%c0_17, %c8] : memref<8x32xf32, #tpu.memory_space<vmem>>, vector<8x8xf32>
    tpu.vector_store %arg3[%c0_17, %c8], %51 {strides = array<i32>} : memref<8x32xf32, #tpu.memory_space<vmem>>, vector<8x8xf32>,
    %53 = vector.extract_strided_slice %18 {offsets = [0, 16], sizes = [8, 8], strides = [1, 1]} : vector<8x96xf32> to vector<8x8xf32>
    %54 = vector.extract_strided_slice %18 {offsets = [0, 48], sizes = [8, 8], strides = [1, 1]} : vector<8x96xf32> to vector<8x8xf32>
    %55 = vector.extract_strided_slice %18 {offsets = [0, 80], sizes = [8, 8], strides = [1, 1]} : vector<8x96xf32> to vector<8x8xf32>
    %cst_18 = arith.constant dense<0.000000e+00> : vector<8x8xf32>
    %56 = tpu.matmul %53, %54, %cst_18 {dimension_numbers = #tpu.dot_dimension_numbers<[1], [1], [0], [0], [0, 0, 1, 0], [], []>} : vector<8x8xf32>, vector<8x8xf32>, vector<8x8xf32> -> vector<8x8xf32>
    %57 = arith.addf %56, %2 : vector<8x8xf32>
    %cst_19 = arith.constant dense<0xFF800000> : vector<8xf32>
    %58 = vector.multi_reduction <maximumf>, %57, %cst_19 [1] : vector<8x8xf32> to vector<8xf32>
    %59 = vector.shape_cast %58 : vector<8xf32> to vector<8x1xf32>
    %60 = vector.broadcast %59 : vector<8x1xf32> to vector<8x8xf32>
    %61 = arith.subf %57, %60 : vector<8x8xf32>
    %62 = math.exp %61 : vector<8x8xf32>
    %cst_20 = arith.constant dense<0.000000e+00> : vector<8xf32>
    %63 = vector.multi_reduction <add>, %62, %cst_20 [1] : vector<8x8xf32> to vector<8xf32>
    %64 = vector.shape_cast %63 : vector<8xf32> to vector<8x1xf32>
    %65 = tpu.reciprocal %64 {approx = true} : vector<8x1xf32> -> vector<8x1xf32>
    %66 = vector.broadcast %65 : vector<8x1xf32> to vector<8x8xf32>
    %67 = arith.mulf %62, %66 : vector<8x8xf32>
    %cst_21 = arith.constant dense<0.000000e+00> : vector<8x8xf32>
    %68 = tpu.matmul %67, %55, %cst_21 {dimension_numbers = #tpu.dot_dimension_numbers<[1], [0], [0], [1], [0, 0, 1, 1], [], []>} : vector<8x8xf32>, vector<8x8xf32>, vector<8x8xf32> -> vector<8x8xf32>
    %c0_22 = arith.constant 0 : index
    %c16 = arith.constant 16 : index
    %69 = vector.load %arg3[%c0_22, %c16] : memref<8x32xf32, #tpu.memory_space<vmem>>, vector<8x8xf32>
    tpu.vector_store %arg3[%c0_22, %c16], %68 {strides = array<i32>} : memref<8x32xf32, #tpu.memory_space<vmem>>, vector<8x8xf32>,
    %70 = vector.extract_strided_slice %18 {offsets = [0, 24], sizes = [8, 8], strides = [1, 1]} : vector<8x96xf32> to vector<8x8xf32>
    %71 = vector.extract_strided_slice %18 {offsets = [0, 56], sizes = [8, 8], strides = [1, 1]} : vector<8x96xf32> to vector<8x8xf32>
    %72 = vector.extract_strided_slice %18 {offsets = [0, 88], sizes = [8, 8], strides = [1, 1]} : vector<8x96xf32> to vector<8x8xf32>
    %cst_23 = arith.constant dense<0.000000e+00> : vector<8x8xf32>
    %73 = tpu.matmul %70, %71, %cst_23 {dimension_numbers = #tpu.dot_dimension_numbers<[1], [1], [0], [0], [0, 0, 1, 0], [], []>} : vector<8x8xf32>, vector<8x8xf32>, vector<8x8xf32> -> vector<8x8xf32>
    %74 = arith.addf %73, %2 : vector<8x8xf32>
    %cst_24 = arith.constant dense<0xFF800000> : vector<8xf32>
    %75 = vector.multi_reduction <maximumf>, %74, %cst_24 [1] : vector<8x8xf32> to vector<8xf32>
    %76 = vector.shape_cast %75 : vector<8xf32> to vector<8x1xf32>
    %77 = vector.broadcast %76 : vector<8x1xf32> to vector<8x8xf32>
    %78 = arith.subf %74, %77 : vector<8x8xf32>
    %79 = math.exp %78 : vector<8x8xf32>
    %cst_25 = arith.constant dense<0.000000e+00> : vector<8xf32>
    %80 = vector.multi_reduction <add>, %79, %cst_25 [1] : vector<8x8xf32> to vector<8xf32>
    %81 = vector.shape_cast %80 : vector<8xf32> to vector<8x1xf32>
    %82 = tpu.reciprocal %81 {approx = true} : vector<8x1xf32> -> vector<8x1xf32>
    %83 = vector.broadcast %82 : vector<8x1xf32> to vector<8x8xf32>
    %84 = arith.mulf %79, %83 : vector<8x8xf32>
    %cst_26 = arith.constant dense<0.000000e+00> : vector<8x8xf32>
    %85 = tpu.matmul %84, %72, %cst_26 {dimension_numbers = #tpu.dot_dimension_numbers<[1], [0], [0], [1], [0, 0, 1, 1], [], []>} : vector<8x8xf32>, vector<8x8xf32>, vector<8x8xf32> -> vector<8x8xf32>
    %c0_27 = arith.constant 0 : index
    %c24 = arith.constant 24 : index
    %86 = vector.load %arg3[%c0_27, %c24] : memref<8x32xf32, #tpu.memory_space<vmem>>, vector<8x8xf32>
    tpu.vector_store %arg3[%c0_27, %c24], %85 {strides = array<i32>} : memref<8x32xf32, #tpu.memory_space<vmem>>, vector<8x8xf32>,
    %c0_28 = arith.constant 0 : index
    %c0_29 = arith.constant 0 : index
    %87 = vector.load %arg3[%c0_28, %c0_29] : memref<8x32xf32, #tpu.memory_space<vmem>>, vector<8x32xf32>
    %cst_30 = arith.constant dense<0.000000e+00> : vector<8x32xf32>
    %88 = tpu.matmul %87, %4, %cst_30 {dimension_numbers = #tpu.dot_dimension_numbers<[1], [0], [0], [1], [0, 0, 1, 1], [], []>} : vector<8x32xf32>, vector<32x32xf32>, vector<8x32xf32> -> vector<8x32xf32>
    %89 = vector.broadcast %9 : vector<1x32xf32> to vector<8x32xf32>
    %90 = arith.addf %88, %89 : vector<8x32xf32>
    %91 = arith.addf %1, %90 : vector<8x32xf32>
    %cst_31 = arith.constant dense<0.000000e+00> : vector<8xf32>
    %92 = vector.multi_reduction <add>, %91, %cst_31 [1] : vector<8x32xf32> to vector<8xf32>
    %93 = vector.shape_cast %92 : vector<8xf32> to vector<8x1xf32>
    %cst_32 = arith.constant 3.200000e+01 : f32
    %94 = vector.broadcast %cst_32 : f32 to vector<8x1xf32>
    %95 = arith.divf %93, %94 : vector<8x1xf32>
    %96 = vector.broadcast %95 : vector<8x1xf32> to vector<8x32xf32>
    %97 = arith.subf %91, %96 : vector<8x32xf32>
    %98 = arith.mulf %97, %97 : vector<8x32xf32>
    %cst_33 = arith.constant dense<0.000000e+00> : vector<8xf32>
    %99 = vector.multi_reduction <add>, %98, %cst_33 [1] : vector<8x32xf32> to vector<8xf32>
    %100 = vector.shape_cast %99 : vector<8xf32> to vector<8x1xf32>
    %cst_34 = arith.constant 3.200000e+01 : f32
    %101 = vector.broadcast %cst_34 : f32 to vector<8x1xf32>
    %102 = arith.divf %100, %101 : vector<8x1xf32>
    %103 = vector.broadcast %95 : vector<8x1xf32> to vector<8x32xf32>
    %104 = arith.subf %91, %103 : vector<8x32xf32>
    %cst_35 = arith.constant 9.99999974E-6 : f32
    %105 = vector.broadcast %cst_35 : f32 to vector<8x1xf32>
    %106 = arith.addf %102, %105 : vector<8x1xf32>
    %107 = math.rsqrt %106 : vector<8x1xf32>
    %108 = vector.broadcast %107 : vector<8x1xf32> to vector<8x32xf32>
    %109 = arith.mulf %104, %108 : vector<8x32xf32>
    %110 = vector.broadcast %10 : vector<1x32xf32> to vector<8x32xf32>
    %111 = arith.mulf %109, %110 : vector<8x32xf32>
    %112 = vector.broadcast %11 : vector<1x32xf32> to vector<8x32xf32>
    %113 = arith.addf %111, %112 : vector<8x32xf32>
    %cst_36 = arith.constant dense<0.000000e+00> : vector<8x64xf32>
    %114 = tpu.matmul %113, %5, %cst_36 {dimension_numbers = #tpu.dot_dimension_numbers<[1], [0], [0], [1], [0, 0, 1, 1], [], []>} : vector<8x32xf32>, vector<32x64xf32>, vector<8x64xf32> -> vector<8x64xf32>
    %115 = vector.broadcast %12 : vector<1x64xf32> to vector<8x64xf32>
    %116 = arith.addf %114, %115 : vector<8x64xf32>
    %cst_37 = arith.constant 5.000000e-01 : f32
    %117 = vector.broadcast %cst_37 : f32 to vector<8x64xf32>
    %118 = arith.mulf %117, %116 : vector<8x64xf32>
    %cst_38 = arith.constant 4.471500e-02 : f32
    %119 = vector.broadcast %cst_38 : f32 to vector<8x64xf32>
    %120 = arith.mulf %119, %116 : vector<8x64xf32>
    %121 = arith.mulf %120, %116 : vector<8x64xf32>
    %122 = arith.mulf %121, %116 : vector<8x64xf32>
    %123 = arith.addf %116, %122 : vector<8x64xf32>
    %cst_39 = arith.constant 0.797884583 : f32
    %124 = vector.broadcast %cst_39 : f32 to vector<8x64xf32>
    %125 = arith.mulf %124, %123 : vector<8x64xf32>
    %126 = math.tanh %125 : vector<8x64xf32>
    %cst_40 = arith.constant 1.000000e+00 : f32
    %127 = vector.broadcast %cst_40 : f32 to vector<8x64xf32>
    %128 = arith.addf %127, %126 : vector<8x64xf32>
    %129 = arith.mulf %118, %128 : vector<8x64xf32>
    %cst_41 = arith.constant dense<0.000000e+00> : vector<8x32xf32>
    %130 = tpu.matmul %129, %6, %cst_41 {dimension_numbers = #tpu.dot_dimension_numbers<[1], [0], [0], [1], [0, 0, 1, 1], [], []>} : vector<8x64xf32>, vector<64x32xf32>, vector<8x32xf32> -> vector<8x32xf32>
    %131 = vector.broadcast %13 : vector<1x32xf32> to vector<8x32xf32>
    %132 = arith.addf %130, %131 : vector<8x32xf32>
    %133 = arith.addf %113, %132 : vector<8x32xf32>
    %cst_42 = arith.constant dense<0.000000e+00> : vector<8xf32>
    %134 = vector.multi_reduction <add>, %133, %cst_42 [1] : vector<8x32xf32> to vector<8xf32>
    %135 = vector.shape_cast %134 : vector<8xf32> to vector<8x1xf32>
    %cst_43 = arith.constant 3.200000e+01 : f32
    %136 = vector.broadcast %cst_43 : f32 to vector<8x1xf32>
    %137 = arith.divf %135, %136 : vector<8x1xf32>
    %138 = vector.broadcast %137 : vector<8x1xf32> to vector<8x32xf32>
    %139 = arith.subf %133, %138 : vector<8x32xf32>
    %140 = arith.mulf %139, %139 : vector<8x32xf32>
    %cst_44 = arith.constant dense<0.000000e+00> : vector<8xf32>
    %141 = vector.multi_reduction <add>, %140, %cst_44 [1] : vector<8x32xf32> to vector<8xf32>
    %142 = vector.shape_cast %141 : vector<8xf32> to vector<8x1xf32>
    %cst_45 = arith.constant 3.200000e+01 : f32
    %143 = vector.broadcast %cst_45 : f32 to vector<8x1xf32>
    %144 = arith.divf %142, %143 : vector<8x1xf32>
    %145 = vector.broadcast %137 : vector<8x1xf32> to vector<8x32xf32>
    %146 = arith.subf %133, %145 : vector<8x32xf32>
    %cst_46 = arith.constant 9.99999974E-6 : f32
    %147 = vector.broadcast %cst_46 : f32 to vector<8x1xf32>
    %148 = arith.addf %144, %147 : vector<8x1xf32>
    %149 = math.rsqrt %148 : vector<8x1xf32>
    %150 = vector.broadcast %149 : vector<8x1xf32> to vector<8x32xf32>
    %151 = arith.mulf %146, %150 : vector<8x32xf32>
    %152 = vector.broadcast %14 : vector<1x32xf32> to vector<8x32xf32>
    %153 = arith.mulf %151, %152 : vector<8x32xf32>
    %154 = vector.broadcast %15 : vector<1x32xf32> to vector<8x32xf32>
    %155 = arith.addf %153, %154 : vector<8x32xf32>
    %c0_47 = arith.constant 0 : index
    %c0_48 = arith.constant 0 : index
    %156 = vector.load %arg2[%c0_47, %c0_48] : memref<8x32xf32, #tpu.memory_space<vmem>>, vector<8x32xf32>
    tpu.vector_store %arg2[%c0_47, %c0_48], %155 {strides = array<i32>} : memref<8x32xf32, #tpu.memory_space<vmem>>, vector<8x32xf32>,
    return
  }
}

</mosaic_0001>

<llo_original>
// kernel: graph_encoder_forward.1
$region0: #{graph_encoder_forward.1}
  #allocation0 [shape = 'u32[]', space=smem, size = 0x4, offset = 0x4, fixed_abs, tag = 'smem constant byte address 0x4 - core index']
  #allocation1 [shape = 'u32[72,128]{1,0:T(1,128)}', space=vmem, size = 0x9000, scoped, tag = 'internal scratch']
  #allocation2 [shape = 'f32[8,32]{1,0:T(8,128)}', space=vmem, size = 0x1000, scoped, tag = 'scratch operand']
  %s0 = inlined_call_operand.hbm [shape: f32[8,40], index: 0, kind: input, shape index: {}]
  %s1 = inlined_call_operand.hbm [shape: f32[168,96], index: 1, kind: input, shape index: {}]
  %s2 = inlined_call_operand.hbm [shape: f32[8,32], index: 2, kind: output, shape index: {}]
  %s3 = sld [smem:[#allocation0]]
  $region26: #{graph_encoder_forward.1} parent=0
    _
  %s5 = ssub.s32 1, %s3
  %s6 = scalar_select 0, %s5, %s3
  $region1: #{graph_encoder_forward.1} parent=0
    #allocation3 [shape = 'u8[4096]{0}', space=vmem, size = 0x1000, scoped, tag = 'input window, operand 0, single buffered']
    #allocation4 [shape = 's32[1]{0}', space=sflag, size = 0x4, scoped, tag = 'scoped memory for graph_encoder_forward.1']
    #allocation5 [shape = 's32[1]{0}', space=sflag, size = 0x4, scoped, tag = 'scoped memory for graph_encoder_forward.1']
    #allocation6 [shape = 'u8[86016]{0}', space=vmem, size = 0x15000, scoped, tag = 'input window, operand 1, single buffered']
    #allocation7 [shape = 's32[1]{0}', space=sflag, size = 0x4, scoped, tag = 'scoped memory for graph_encoder_forward.1']
    #allocation8 [shape = 'u8[4096]{0}', space=vmem, size = 0x1000, scoped, tag = 'output window, operand 0, single buffered']
    %7 = vsyncpa [#allocation4], 0
    %8 = vsyncpa [#allocation7], 0
    %9 = vsyncpa [#allocation5], 0
    // Predicated region
    $region2: #{graph_encoder_forward.1} parent=1 // pred_check
      _
    $region3: #{graph_encoder_forward.1} parent=1 // pred_check_branch
      %11 = sbr.rel (0) target = $region5
    $region4: #{graph_encoder_forward.1} parent=1 // pred_region
      %13 = vsyncadd [#allocation4], 0
      %s15 = sshll.u32 %s0, 4
      %s16 = int_to_ptr.hbm [resolvable:$true] %s15
      %s17 = sshll.u32 [#allocation3], 4
      %s18 = int_to_ptr.vmem [resolvable:$true] %s17
      %20 = dma.hbm_to_vmem [thread:$0]  %s16, 128, %s18, [#allocation4]
    $region5: #{graph_encoder_forward.1} parent=1 // pred_fallthru
      _
    // Predicated region
    $region6: #{graph_encoder_forward.1} parent=1 // pred_check
      _
    $region7: #{graph_encoder_forward.1} parent=1 // pred_check_branch
      %22 = sbr.rel (0) target = $region9
    $region8: #{graph_encoder_forward.1} parent=1 // pred_region
      %24 = vsyncadd [#allocation7], 0
      %s25 = sshll.u32 %s1, 4
      %s26 = int_to_ptr.hbm [resolvable:$true] %s25
      %s27 = sshll.u32 [#allocation6], 4
      %s28 = int_to_ptr.vmem [resolvable:$true] %s27
      %33 = dma.hbm_to_vmem [thread:$0]  %s26, 2688, %s28, [#allocation7], 128, 128, 8
    $region9: #{graph_encoder_forward.1} parent=1 // pred_fallthru
      _
    // Predicated region
    $region10: #{graph_encoder_forward.1} parent=1 // pred_check
      _
    $region11: #{graph_encoder_forward.1} parent=1 // pred_check_branch
      %35 = sbr.rel (0) target = $region13
    $region12: #{graph_encoder_forward.1} parent=1 // pred_region
      %37 = dma.done [#allocation4], 128
    $region13: #{graph_encoder_forward.1} parent=1 // pred_fallthru
      _
    // Predicated region
    $region14: #{graph_encoder_forward.1} parent=1 // pred_check
      _
    $region15: #{graph_encoder_forward.1} parent=1 // pred_check_branch
      %39 = sbr.rel (0) target = $region17
    $region16: #{graph_encoder_forward.1} parent=1 // pred_region
      %41 = dma.done [#allocation7], 2688
    $region17: #{graph_encoder_forward.1} parent=1 // pred_fallthru
      _
    %v42 = vld [vmem:[#allocation3] sm:$0xff]
    %v43 = vld [vmem:[#allocation6] sm:$0xff]
    %v44 = vld [vmem:[#allocation6 + $0x8] sm:$0xff]
    %v45 = vld [vmem:[#allocation6 + $0x10] sm:$0xff]
    %v46 = vld [vmem:[#allocation6 + $0x18] sm:$0xff]
    %v47 = vld [vmem:[#allocation6 + $0x20] sm:$0xff]
    %v48 = vld [vmem:[#allocation6 + $0x28] sm:$0xff]
    %v49 = vld [vmem:[#allocation6 + $0x30] sm:$0xff]
    %v50 = vld [vmem:[#allocation6 + $0x38] sm:$0xff]
    %v51 = vld [vmem:[#allocation6 + $0x40] sm:$0xff]
    %v52 = vld [vmem:[#allocation6 + $0x48] sm:$0xff]
    %v53 = vld [vmem:[#allocation6 + $0x50] sm:$0xff]
    %v54 = vld [vmem:[#allocation6 + $0x58] sm:$0xff]
    %v55 = vld [vmem:[#allocation6 + $0x60] sm:$0xff]
    %v56 = vld [vmem:[#allocation6 + $0x68] sm:$0xff]
    %v57 = vld [vmem:[#allocation6 + $0x70] sm:$0xff]
    %v58 = vld [vmem:[#allocation6 + $0x78] sm:$0xff]
    %v59 = vld [vmem:[#allocation6 + $0x80] sm:$0xff]
    %v60 = vld [vmem:[#allocation6 + $0x88] sm:$0xff]
    %v61 = vld [vmem:[#allocation6 + $0x90] sm:$0xff]
    %v62 = vld [vmem:[#allocation6 + $0x98] sm:$0xff]
    %v63 = vld [vmem:[#allocation6 + $0xa0] sm:$0xff]
    %v64 = vperm.slane %v63, 0
    %vm65 = vcmask 261120
    %v67 = vsel %vm65, %v42, 0
    %69 = vmatpush.msra.mxu0 0.0
    %70 = vmatpush.msra.mxu0 0.0
    %71 = vmatpush.msra.mxu0 0.0
    %72 = vmatpush.msra.mxu0 0.0
    %73 = vmatpush.msra.mxu0 0.0
    %74 = vmatpush.msra.mxu0 0.0
    %75 = vmatpush.msra.mxu0 0.0
    %76 = vmatpush.msra.mxu0 0.0
    %77 = vmatpush.msra.mxu0 0.0
    %78 = vmatpush.msra.mxu0 0.0
    %79 = vmatpush.msra.mxu0 0.0
    %80 = vmatpush.msra.mxu0 0.0
    %81 = vmatpush.msra.mxu0 %v46
    %82 = vmatpush.msra.mxu0 %v45
    %83 = vmatpush.msra.mxu0 %v44
    %84 = vmatpush.msra.mxu0 %v43
    %85 = vmatmul.f32.gmra.mxu0 %v67
    %v86 = vpop.f32.mrf.mxu0
    %v87 = vadd.f32 %v64, %v86
    %88 = vdwg.mxu0
    %90 = vrot.lane.b32.xlu0 %v87, 96
    %v91 = vpop.permute.xlu0 %90
    %92 = vrot.lane.b32.xlu0 %v42, 96
    %v93 = vpop.permute.xlu0 %92
    %vm95 = vcmask 64512
    %v96 = vsel %vm95, %v87, 0
    %v98 = vsel %vm95, %v91, 0
    %100 = vmatpush.xpose.msra.mxu0 0.0
    %101 = vmatpush.xpose.msra.mxu0 0.0
    %102 = vmatpush.xpose.msra.mxu0 0.0
    %103 = vmatpush.xpose.msra.mxu0 0.0
    %104 = vmatpush.xpose.msra.mxu0 0.0
    %105 = vmatpush.xpose.msra.mxu0 0.0
    %106 = vmatpush.xpose.msra.mxu0 0.0
    %107 = vmatpush.xpose.msra.mxu0 0.0
    %108 = vmatpush.xpose.msra.mxu0 0.0
    %109 = vmatpush.xpose.msra.mxu0 0.0
    %110 = vmatpush.xpose.msra.mxu0 0.0
    %111 = vmatpush.xpose.msra.mxu0 0.0
    %112 = vmatpush.xpose.msra.mxu0 0.0
    %113 = vmatpush.xpose.msra.mxu0 0.0
    %114 = vmatpush.xpose.msra.mxu0 0.0
    %115 = vmatpush.xpose.msra.mxu0 %v98
    %116 = vmatmul.f32.gmra.mxu0 %v96
    %v117 = vpop.f32.mrf.mxu0
    %v118 = vadd.f32 %v93, %v117
    %119 = vdwg.mxu0
    %v120 = vsel %vm95, %v118, -inf
    %121 = vmax.xlane.f32.xlu0 %v120
    %v122 = vpop.xlane.xlu0 %121
    %v123 = vsub.f32 %v118, %v122
    %v124 = vmul.f32 %v123, 1.442695
    %v125 = vpow.pop %v124
    %v126 = vsel %vm95, %v125, 0.0
    %127 = vadd.xlane.f32.xlu0 %v126
    %v128 = vpop.xlane.xlu0 %127
    %v129 = vrcp.pop %v128
    %v130 = vmul.f32 %v125, %v129
    %131 = vrot.lane.b32.xlu0 %v87, 64
    %v132 = vpop.permute.xlu0 %131
    %v135 = vsel %vm95, %v130, 0
    %137 = vmatpush.msra.mxu0 0.0
    %138 = vmatpush.msra.mxu0 0.0
    %139 = vmatpush.msra.mxu0 0.0
    %140 = vmatpush.msra.mxu0 0.0
    %141 = vmatpush.msra.mxu0 0.0
    %142 = vmatpush.msra.mxu0 0.0
    %143 = vmatpush.msra.mxu0 0.0
    %144 = vmatpush.msra.mxu0 0.0
    %145 = vmatpush.msra.mxu0 0.0
    %146 = vmatpush.msra.mxu0 0.0
    %147 = vmatpush.msra.mxu0 0.0
    %148 = vmatpush.msra.mxu0 0.0
    %149 = vmatpush.msra.mxu0 0.0
    %150 = vmatpush.msra.mxu0 0.0
    %151 = vmatpush.msra.mxu0 0.0
    %152 = vmatpush.msra.mxu0 %v132
    %153 = vmatmul.f32.gmra.mxu0 %v135
    %v154 = vpop.f32.mrf.mxu0
    %v155 = vadd.f32 0.0, %v154
    %156 = vdwg.mxu0
    %157 = vst.msk [vmem:[#allocation2] sm:$0xff] %vm95, %v155
    %158 = vrot.lane.b32.xlu0 %v87, 120
    %v159 = vpop.permute.xlu0 %158
    %160 = vrot.lane.b32.xlu0 %v87, 88
    %v161 = vpop.permute.xlu0 %160
    %v162 = vsel %vm95, %v159, 0
    %v164 = vsel %vm95, %v161, 0
    %166 = vmatpush.xpose.msra.mxu0 0.0
    %167 = vmatpush.xpose.msra.mxu0 0.0
    %168 = vmatpush.xpose.msra.mxu0 0.0
    %169 = vmatpush.xpose.msra.mxu0 0.0
    %170 = vmatpush.xpose.msra.mxu0 0.0
    %171 = vmatpush.xpose.msra.mxu0 0.0
    %172 = vmatpush.xpose.msra.mxu0 0.0
    %173 = vmatpush.xpose.msra.mxu0 0.0
    %174 = vmatpush.xpose.msra.mxu0 0.0
    %175 = vmatpush.xpose.msra.mxu0 0.0
    %176 = vmatpush.xpose.msra.mxu0 0.0
    %177 = vmatpush.xpose.msra.mxu0 0.0
    %178 = vmatpush.xpose.msra.mxu0 0.0
    %179 = vmatpush.xpose.msra.mxu0 0.0
    %180 = vmatpush.xpose.msra.mxu0 0.0
    %181 = vmatpush.xpose.msra.mxu0 %v164
    %182 = vmatmul.f32.gmra.mxu0 %v162
    %v183 = vpop.f32.mrf.mxu0
    %v184 = vadd.f32 %v93, %v183
    %185 = vdwg.mxu0
    %v186 = vsel %vm95, %v184, -inf
    %187 = vmax.xlane.f32.xlu0 %v186
    %v188 = vpop.xlane.xlu0 %187
    %v189 = vsub.f32 %v184, %v188
    %v190 = vmul.f32 %v189, 1.442695
    %v191 = vpow.pop %v190
    %v192 = vsel %vm95, %v191, 0.0
    %193 = vadd.xlane.f32.xlu0 %v192
    %v194 = vpop.xlane.xlu0 %193
    %v195 = vrcp.pop %v194
    %v196 = vmul.f32 %v191, %v195
    %197 = vrot.lane.b32.xlu0 %v87, 56
    %v198 = vpop.permute.xlu0 %197
    %v201 = vsel %vm95, %v196, 0
    %203 = vmatpush.msra.mxu0 0.0
    %204 = vmatpush.msra.mxu0 0.0
    %205 = vmatpush.msra.mxu0 0.0
    %206 = vmatpush.msra.mxu0 0.0
    %207 = vmatpush.msra.mxu0 0.0
    %208 = vmatpush.msra.mxu0 0.0
    %209 = vmatpush.msra.mxu0 0.0
    %210 = vmatpush.msra.mxu0 0.0
    %211 = vmatpush.msra.mxu0 0.0
    %212 = vmatpush.msra.mxu0 0.0
    %213 = vmatpush.msra.mxu0 0.0
    %214 = vmatpush.msra.mxu0 0.0
    %215 = vmatpush.msra.mxu0 0.0
    %216 = vmatpush.msra.mxu0 0.0
    %217 = vmatpush.msra.mxu0 0.0
    %218 = vmatpush.msra.mxu0 %v198
    %219 = vmatmul.f32.gmra.mxu0 %v201
    %v220 = vpop.f32.mrf.mxu0
    %v221 = vadd.f32 0.0, %v220
    %222 = vdwg.mxu0
    %224 = vrot.lane.b32.xlu0 %v221, 8
    %v225 = vpop.permute.xlu0 %224
    %vm227 = vcmask 130112
    %228 = vst.msk [vmem:[#allocation2] sm:$0xff] %vm227, %v225
    %229 = vrot.lane.b32.xlu0 %v87, 112
    %v230 = vpop.permute.xlu0 %229
    %231 = vrot.lane.b32.xlu0 %v87, 80
    %v232 = vpop.permute.xlu0 %231
    %v233 = vsel %vm95, %v230, 0
    %v235 = vsel %vm95, %v232, 0
    %237 = vmatpush.xpose.msra.mxu0 0.0
    %238 = vmatpush.xpose.msra.mxu0 0.0
    %239 = vmatpush.xpose.msra.mxu0 0.0
    %240 = vmatpush.xpose.msra.mxu0 0.0
    %241 = vmatpush.xpose.msra.mxu0 0.0
    %242 = vmatpush.xpose.msra.mxu0 0.0
    %243 = vmatpush.xpose.msra.mxu0 0.0
    %244 = vmatpush.xpose.msra.mxu0 0.0
    %245 = vmatpush.xpose.msra.mxu0 0.0
    %246 = vmatpush.xpose.msra.mxu0 0.0
    %247 = vmatpush.xpose.msra.mxu0 0.0
    %248 = vmatpush.xpose.msra.mxu0 0.0
    %249 = vmatpush.xpose.msra.mxu0 0.0
    %250 = vmatpush.xpose.msra.mxu0 0.0
    %251 = vmatpush.xpose.msra.mxu0 0.0
    %252 = vmatpush.xpose.msra.mxu0 %v235
    %253 = vmatmul.f32.gmra.mxu0 %v233
    %v254 = vpop.f32.mrf.mxu0
    %v255 = vadd.f32 %v93, %v254
    %256 = vdwg.mxu0
    %v257 = vsel %vm95, %v255, -inf
    %258 = vmax.xlane.f32.xlu0 %v257
    %v259 = vpop.xlane.xlu0 %258
    %v260 = vsub.f32 %v255, %v259
    %v261 = vmul.f32 %v260, 1.442695
    %v262 = vpow.pop %v261
    %v263 = vsel %vm95, %v262, 0.0
    %264 = vadd.xlane.f32.xlu0 %v263
    %v265 = vpop.xlane.xlu0 %264
    %v266 = vrcp.pop %v265
    %v267 = vmul.f32 %v262, %v266
    %268 = vrot.lane.b32.xlu0 %v87, 48
    %v269 = vpop.permute.xlu0 %268
    %v272 = vsel %vm95, %v267, 0
    %274 = vmatpush.msra.mxu0 0.0
    %275 = vmatpush.msra.mxu0 0.0
    %276 = vmatpush.msra.mxu0 0.0
    %277 = vmatpush.msra.mxu0 0.0
    %278 = vmatpush.msra.mxu0 0.0
    %279 = vmatpush.msra.mxu0 0.0
    %280 = vmatpush.msra.mxu0 0.0
    %281 = vmatpush.msra.mxu0 0.0
    %282 = vmatpush.msra.mxu0 0.0
    %283 = vmatpush.msra.mxu0 0.0
    %284 = vmatpush.msra.mxu0 0.0
    %285 = vmatpush.msra.mxu0 0.0
    %286 = vmatpush.msra.mxu0 0.0
    %287 = vmatpush.msra.mxu0 0.0
    %288 = vmatpush.msra.mxu0 0.0
    %289 = vmatpush.msra.mxu0 %v269
    %290 = vmatmul.f32.gmra.mxu0 %v272
    %v291 = vpop.f32.mrf.mxu0
    %v292 = vadd.f32 0.0, %v291
    %293 = vdwg.mxu0
    %295 = vrot.lane.b32.xlu0 %v292, 16
    %v296 = vpop.permute.xlu0 %295
    %vm298 = vcmask 195712
    %299 = vst.msk [vmem:[#allocation2] sm:$0xff] %vm298, %v296
    %300 = vrot.lane.b32.xlu0 %v87, 104
    %v301 = vpop.permute.xlu0 %300
    %302 = vrot.lane.b32.xlu0 %v87, 72
    %v303 = vpop.permute.xlu0 %302
    %v304 = vsel %vm95, %v301, 0
    %v306 = vsel %vm95, %v303, 0
    %308 = vmatpush.xpose.msra.mxu0 0.0
    %309 = vmatpush.xpose.msra.mxu0 0.0
    %310 = vmatpush.xpose.msra.mxu0 0.0
    %311 = vmatpush.xpose.msra.mxu0 0.0
    %312 = vmatpush.xpose.msra.mxu0 0.0
    %313 = vmatpush.xpose.msra.mxu0 0.0
    %314 = vmatpush.xpose.msra.mxu0 0.0
    %315 = vmatpush.xpose.msra.mxu0 0.0
    %316 = vmatpush.xpose.msra.mxu0 0.0
    %317 = vmatpush.xpose.msra.mxu0 0.0
    %318 = vmatpush.xpose.msra.mxu0 0.0
    %319 = vmatpush.xpose.msra.mxu0 0.0
    %320 = vmatpush.xpose.msra.mxu0 0.0
    %321 = vmatpush.xpose.msra.mxu0 0.0
    %322 = vmatpush.xpose.msra.mxu0 0.0
    %323 = vmatpush.xpose.msra.mxu0 %v306
    %324 = vmatmul.f32.gmra.mxu0 %v304
    %v325 = vpop.f32.mrf.mxu0
    %v326 = vadd.f32 %v93, %v325
    %327 = vdwg.mxu0
    %v328 = vsel %vm95, %v326, -inf
    %329 = vmax.xlane.f32.xlu0 %v328
    %v330 = vpop.xlane.xlu0 %329
    %v331 = vsub.f32 %v326, %v330
    %v332 = vmul.f32 %v331, 1.442695
    %v333 = vpow.pop %v332
    %v334 = vsel %vm95, %v333, 0.0
    %335 = vadd.xlane.f32.xlu0 %v334
    %v336 = vpop.xlane.xlu0 %335
    %v337 = vrcp.pop %v336
    %v338 = vmul.f32 %v333, %v337
    %339 = vrot.lane.b32.xlu0 %v87, 40
    %v340 = vpop.permute.xlu0 %339
    %v343 = vsel %vm95, %v338, 0
    %345 = vmatpush.msra.mxu0 0.0
    %346 = vmatpush.msra.mxu0 0.0
    %347 = vmatpush.msra.mxu0 0.0
    %348 = vmatpush.msra.mxu0 0.0
    %349 = vmatpush.msra.mxu0 0.0
    %350 = vmatpush.msra.mxu0 0.0
    %351 = vmatpush.msra.mxu0 0.0
    %352 = vmatpush.msra.mxu0 0.0
    %353 = vmatpush.msra.mxu0 0.0
    %354 = vmatpush.msra.mxu0 0.0
    %355 = vmatpush.msra.mxu0 0.0
    %356 = vmatpush.msra.mxu0 0.0
    %357 = vmatpush.msra.mxu0 0.0
    %358 = vmatpush.msra.mxu0 0.0
    %359 = vmatpush.msra.mxu0 0.0
    %360 = vmatpush.msra.mxu0 %v340
    %361 = vmatmul.f32.gmra.mxu0 %v343
    %v362 = vpop.f32.mrf.mxu0
    %v363 = vadd.f32 0.0, %v362
    %364 = vdwg.mxu0
    %366 = vrot.lane.b32.xlu0 %v363, 24
    %v367 = vpop.permute.xlu0 %366
    %vm369 = vcmask 261312
    %370 = vst.msk [vmem:[#allocation2] sm:$0xff] %vm369, %v367
    %v371 = vld [vmem:[#allocation2] sm:$0xff]
    %v372 = vperm.slane %v63, 1
    %v374 = vsel %vm65, %v371, 0
    %376 = vmatpush.msra.mxu0 0.0
    %377 = vmatpush.msra.mxu0 0.0
    %378 = vmatpush.msra.mxu0 0.0
    %379 = vmatpush.msra.mxu0 0.0
    %380 = vmatpush.msra.mxu0 0.0
    %381 = vmatpush.msra.mxu0 0.0
    %382 = vmatpush.msra.mxu0 0.0
    %383 = vmatpush.msra.mxu0 0.0
    %384 = vmatpush.msra.mxu0 0.0
    %385 = vmatpush.msra.mxu0 0.0
    %386 = vmatpush.msra.mxu0 0.0
    %387 = vmatpush.msra.mxu0 0.0
    %388 = vmatpush.msra.mxu0 %v50
    %389 = vmatpush.msra.mxu0 %v49
    %390 = vmatpush.msra.mxu0 %v48
    %391 = vmatpush.msra.mxu0 %v47
    %392 = vmatmul.f32.gmra.mxu0 %v374
    %v393 = vpop.f32.mrf.mxu0
    %v394 = vadd.f32 %v372, %v393
    %395 = vdwg.mxu0
    %v396 = vadd.f32 %v42, %v394
    %v397 = vsel %vm65, %v396, 0.0
    %398 = vadd.xlane.f32.xlu0 %v397
    %v399 = vpop.xlane.xlu0 %398
    %v400 = vrcp.pop 32.0
    %v401 = vmul.f32 32.0, %v400
    %v402 = vsub.f32 1.0, %v401
    %v403 = vmul.f32 %v400, %v402
    %v404 = vadd.f32 %v400, %v403
    %vm405 = vweird.f32 %v400
    %v406 = vsel %vm405, %v400, %v404
    %v407 = vmul.f32 %v399, %v406
    %v408 = vsub.f32 %v396, %v407
    %v409 = vmul.f32 %v408, %v408
    %v410 = vsel %vm65, %v409, 0.0
    %411 = vadd.xlane.f32.xlu0 %v410
    %v412 = vpop.xlane.xlu0 %411
    %v413 = vmul.f32 %v412, %v406
    %v414 = vadd.f32 %v413, 1e-05
    %v415 = vrsqrt.pop %v414
    %v416 = vmul.f32 %v415, %v414
    %v417 = vmul.f32 %v416, %v415
    %v418 = vmul.f32 0.5, %v417
    %v419 = vsub.f32 1.5, %v418
    %v420 = vmul.f32 %v415, %v419
    %vm421 = vweird.f32 %v414
    %vm422 = vweird.f32 %v415
    %vm423 = vmor %vm421, %vm422
    %v424 = vsel %vm423, %v415, %v420
    %v425 = vmul.f32 %v408, %v424
    %v426 = vperm.slane %v63, 2
    %v427 = vmul.f32 %v425, %v426
    %v428 = vperm.slane %v63, 3
    %v429 = vadd.f32 %v427, %v428
    %v430 = vperm.slane %v63, 4
    %v432 = vsel %vm65, %v429, 0
    %434 = vmatpush.msra.mxu0 0.0
    %435 = vmatpush.msra.mxu0 0.0
    %436 = vmatpush.msra.mxu0 0.0
    %437 = vmatpush.msra.mxu0 0.0
    %438 = vmatpush.msra.mxu0 0.0
    %439 = vmatpush.msra.mxu0 0.0
    %440 = vmatpush.msra.mxu0 0.0
    %441 = vmatpush.msra.mxu0 0.0
    %442 = vmatpush.msra.mxu0 0.0
    %443 = vmatpush.msra.mxu0 0.0
    %444 = vmatpush.msra.mxu0 0.0
    %445 = vmatpush.msra.mxu0 0.0
    %446 = vmatpush.msra.mxu0 %v54
    %447 = vmatpush.msra.mxu0 %v53
    %448 = vmatpush.msra.mxu0 %v52
    %449 = vmatpush.msra.mxu0 %v51
    %450 = vmatmul.f32.gmra.mxu0 %v432
    %v451 = vpop.f32.mrf.mxu0
    %v452 = vadd.f32 %v430, %v451
    %453 = vdwg.mxu0
    %v454 = vmul.f32 %v452, 0.5
    %v455 = vmul.f32 %v452, 0.044715
    %v456 = vmul.f32 %v455, %v452
    %v457 = vmul.f32 %v456, %v452
    %v458 = vadd.f32 %v452, %v457
    %v459 = vmul.f32 %v458, 0.7978846
    %v460 = vtanh.pop %v459
    %v461 = vadd.f32 %v460, 1.0
    %v462 = vmul.f32 %v454, %v461
    %v463 = vperm.slane %v63, 5
    %vm464 = vcmask 523264
    %v466 = vsel %vm464, %v462, 0
    %468 = vmatpush.msra.mxu0 0.0
    %469 = vmatpush.msra.mxu0 0.0
    %470 = vmatpush.msra.mxu0 0.0
    %471 = vmatpush.msra.mxu0 0.0
    %472 = vmatpush.msra.mxu0 0.0
    %473 = vmatpush.msra.mxu0 0.0
    %474 = vmatpush.msra.mxu0 0.0
    %475 = vmatpush.msra.mxu0 0.0
    %476 = vmatpush.msra.mxu0 %v62
    %477 = vmatpush.msra.mxu0 %v61
    %478 = vmatpush.msra.mxu0 %v60
    %479 = vmatpush.msra.mxu0 %v59
    %480 = vmatpush.msra.mxu0 %v58
    %481 = vmatpush.msra.mxu0 %v57
    %482 = vmatpush.msra.mxu0 %v56
    %483 = vmatpush.msra.mxu0 %v55
    %484 = vmatmul.f32.gmra.mxu0 %v466
    %v485 = vpop.f32.mrf.mxu0
    %v486 = vadd.f32 %v463, %v485
    %487 = vdwg.mxu0
    %v488 = vadd.f32 %v429, %v486
    %v489 = vsel %vm65, %v488, 0.0
    %490 = vadd.xlane.f32.xlu0 %v489
    %v491 = vpop.xlane.xlu0 %490
    %v492 = vmul.f32 %v491, %v406
    %v493 = vsub.f32 %v488, %v492
    %v494 = vmul.f32 %v493, %v493
    %v495 = vsel %vm65, %v494, 0.0
    %496 = vadd.xlane.f32.xlu0 %v495
    %v497 = vpop.xlane.xlu0 %496
    %v498 = vmul.f32 %v497, %v406
    %v499 = vadd.f32 %v498, 1e-05
    %v500 = vrsqrt.pop %v499
    %v501 = vmul.f32 %v500, %v499
    %v502 = vmul.f32 %v501, %v500
    %v503 = vmul.f32 0.5, %v502
    %v504 = vsub.f32 1.5, %v503
    %v505 = vmul.f32 %v500, %v504
    %vm506 = vweird.f32 %v499
    %vm507 = vweird.f32 %v500
    %vm508 = vmor %vm506, %vm507
    %v509 = vsel %vm508, %v500, %v505
    %v510 = vmul.f32 %v493, %v509
    %v511 = vperm.slane %v63, 6
    %v512 = vmul.f32 %v510, %v511
    %v513 = vperm.slane %v63, 7
    %v514 = vadd.f32 %v512, %v513
    %515 = vst.msk [vmem:[#allocation8] sm:$0xff] %vm65, %v514
    // Predicated region
    $region18: #{graph_encoder_forward.1} parent=1 // pred_check
      _
    $region19: #{graph_encoder_forward.1} parent=1 // pred_check_branch
      %517 = sbr.rel (0) target = $region21
    $region20: #{graph_encoder_forward.1} parent=1 // pred_region
      %519 = vsyncadd [#allocation5], 0
      %s521 = sshll.u32 [#allocation8], 4
      %s522 = int_to_ptr.vmem [resolvable:$true] %s521
      %s523 = sshll.u32 %s2, 4
      %s524 = int_to_ptr.hbm [resolvable:$true] %s523
      %526 = dma.vmem_to_hbm [thread:$0]  %s522, 128, %s524, [#allocation5]
    $region21: #{graph_encoder_forward.1} parent=1 // pred_fallthru
      _
    // Predicated region
    $region22: #{graph_encoder_forward.1} parent=1 // pred_check
      _
    $region23: #{graph_encoder_forward.1} parent=1 // pred_check_branch
      %528 = sbr.rel (0) target = $region25
    $region24: #{graph_encoder_forward.1} parent=1 // pred_region
      %530 = dma.done [#allocation5], 128
    $region25: #{graph_encoder_forward.1} parent=1 // pred_fallthru
      _
    %531 = vsyncpa [#allocation4], 1
    %532 = vsyncpa [#allocation7], 1
    %533 = vsyncpa [#allocation5], 1

</llo_original>
